<compile_context>
chip_gen: v5e
topology: v5e:2x2
jax: 0.10.0
libtpu: 0.0.40
codegen_flags: <defaults>
</compile_context>

<pallas_src>
import jax
import jax.numpy as jnp
from jax.experimental import pallas as pl
from jax.experimental.pallas import tpu as pltpu

_LANE = 128


def _make_act_kernel(act_type: str, negative_slope: float):
    """Build the elementwise activation kernel body (relu or leaky_relu)."""
    if act_type == "relu":
        def kernel(x_ref, o_ref):
            x = x_ref[...]
            o_ref[...] = jnp.maximum(x, 0)
        return kernel
    elif act_type == "leaky_relu":
        # Python float -> traced as a literal, not a captured jax constant.
        slope = float(negative_slope)
        def kernel(x_ref, o_ref):
            x = x_ref[...]
            # For 0 <= slope < 1: leaky_relu(x) == max(x, slope * x)
            # (2 VPU ops: vmul + vmax, instead of cmp + mul + select).
            o_ref[...] = jnp.maximum(x, x * slope)
        return kernel
    raise ValueError(act_type)


def _round_up(a: int, b: int) -> int:
    return ((a + b - 1) // b) * b


def activation(x, act_type="relu", negative_slope=0.01, *, target_block_bytes=2 << 20):
    """Apply elementwise activation via a Pallas TPU kernel.

    Works on any input shape/dtype; internally flattens to a lane-dense
    (rows, C) slab (C a multiple of 128). Padding is only materialized when
    the flat size is not a multiple of 128 (ragged case).
    """
    orig_shape = x.shape
    orig_dtype = x.dtype
    itemsize = jnp.dtype(orig_dtype).itemsize
    # sublane packing multiple: 8 for f32, 16 for bf16, 32 for int8/fp8
    sub = max(8, 32 // max(1, itemsize))

    n = x.size
    flat = x.reshape(-1)

    # Fast path: no padding at all when n is already lane-aligned.
    n_pad = (-n) % _LANE
    if n_pad:
        # Ragged tail: one small pad (activation of 0 is 0, sliced off below).
        flat = jnp.concatenate([flat, jnp.zeros((n_pad,), dtype=orig_dtype)])
    n_total = n + n_pad

    # Pick the widest lane-dense width that divides the flat size.
    C = _LANE
    for c in (4096, 2048, 1024, 512, 256):
        if n_total % c == 0:
            C = c
            break
    rows = n_total // C
    x2d = flat.reshape(rows, C)

    # Block sizing: ~target_block_bytes per block, rows rounded to the sublane
    # multiple. Partial last block is handled by Pallas (grid = cdiv).
    tile_rows = max(sub, ((target_block_bytes // (C * itemsize)) // sub) * sub)
    if tile_rows >= rows:
        if rows > sub:
            # Keep at least 2 grid steps so both v7x TensorCores get work.
            tile_rows = _round_up(-(-rows // 2), sub)
        else:
            # Tiny input: single block whose row dim equals the full array dim.
            tile_rows = rows
    grid = (-(-rows // tile_rows),)  # cdiv

    kernel = _make_act_kernel(act_type, negative_slope)

    out2d = pl.pallas_call(
        kernel,
        out_shape=jax.ShapeDtypeStruct((rows, C), orig_dtype),
        grid=grid,
        in_specs=[pl.BlockSpec((tile_rows, C), lambda i: (i, 0))],
        out_specs=pl.BlockSpec((tile_rows, C), lambda i: (i, 0)),
        compiler_params=pltpu.CompilerParams(
            dimension_semantics=("parallel",),
        ),
        cost_estimate=pl.CostEstimate(
            flops=n,
            transcendentals=0,
            bytes_accessed=2 * n * itemsize,
        ),
        # NOTE: input_output_aliases={0: 0} would let this run in place, but it
        # only pays off when the caller donates the buffer at a jit boundary.
    )(x2d)

    if n_pad:
        return out2d.reshape(-1)[:n].reshape(orig_shape)
    return out2d.reshape(orig_shape)


if __name__ == "__main__":
    key = jax.random.PRNGKey(0)
    # NCHW input, matching typical conv-block usage: batch=2, channels=4, 16x16 spatial
    x = jax.random.normal(key, (2, 4, 16, 16), dtype=jnp.float32)

    # ReLU
    y_relu = jax.block_until_ready(activation(x, act_type="relu"))
    ref_relu = jnp.maximum(x, 0.0)
    assert jnp.allclose(y_relu, ref_relu), "relu mismatch"

    # LeakyReLU (default negative_slope=0.01, matching nn.LeakyReLU defaults)
    y_lrelu = jax.block_until_ready(
        activation(x, act_type="leaky_relu", negative_slope=0.01)
    )
    ref_lrelu = jnp.where(x >= 0, x, 0.01 * x)
    assert jnp.allclose(y_lrelu, ref_lrelu), "leaky_relu mismatch"

    # Ragged size (not a multiple of 128) exercises the padded path.
    xr = jax.random.normal(jax.random.PRNGKey(1), (3, 5, 7, 11), dtype=jnp.float32)
    y_r = jax.block_until_ready(activation(xr, act_type="leaky_relu", negative_slope=0.2))
    ref_r = jnp.where(xr >= 0, xr, 0.2 * xr)
    assert jnp.allclose(y_r, ref_r), "ragged leaky_relu mismatch"

    print("KERNEL_OK")
</pallas_src>

<mosaic_0001>
module attributes {stable_mosaic.version = 11 : i64} {
  func.func @kernel(%arg0: i32, %arg1: memref<1x2048xf32, #tpu.memory_space<vmem>>, %arg2: memref<1x2048xf32, #tpu.memory_space<vmem>>) attributes {dimension_semantics = [#tpu.dimension_semantics<parallel>], iteration_bounds = array<i64: 1>, scalar_prefetch = 0 : i64, scratch_operands = 0 : i64, tpu.core_type = #tpu.core_type<tc>, window_params = [{transform_indices = @transform_0, window_bounds = array<i64: 1, 2048>}, {transform_indices = @transform_1, window_bounds = array<i64: 1, 2048>}]} {
    %c0 = arith.constant 0 : index
    %c0_0 = arith.constant 0 : index
    %0 = vector.load %arg1[%c0, %c0_0] : memref<1x2048xf32, #tpu.memory_space<vmem>>, vector<1x2048xf32>
    %cst = arith.constant 0.000000e+00 : f32
    %1 = vector.broadcast %cst : f32 to vector<1x2048xf32>
    %2 = arith.maximumf %0, %1 : vector<1x2048xf32>
    %c0_1 = arith.constant 0 : index
    %c0_2 = arith.constant 0 : index
    %3 = vector.load %arg2[%c0_1, %c0_2] : memref<1x2048xf32, #tpu.memory_space<vmem>>, vector<1x2048xf32>
    tpu.vector_store %arg2[%c0_1, %c0_2], %2 {strides = array<i32>} : memref<1x2048xf32, #tpu.memory_space<vmem>>, vector<1x2048xf32>,
    return
  }
  func.func @transform_0(%arg0: i32) -> (i32, i32) {
    %c0_i32 = arith.constant 0 : i32
    %c0_i32_0 = arith.constant 0 : i32
    return %arg0, %c0_i32 : i32, i32
  }
  func.func @transform_1(%arg0: i32) -> (i32, i32) {
    %c0_i32 = arith.constant 0 : i32
    %c0_i32_0 = arith.constant 0 : i32
    return %arg0, %c0_i32 : i32, i32
  }
}

</mosaic_0001>

<llo_original>
// kernel: tpu_custom_call.1
$region0: #{tpu_custom_call.1}
  #allocation0 [shape = 'u32[]', space=smem, size = 0x4, offset = 0x4, fixed_abs, tag = 'smem constant byte address 0x4 - core index']
  #allocation1 [shape = 'u32[72,128]{1,0:T(1,128)}', space=vmem, size = 0x9000, scoped, tag = 'internal scratch']
  %s0 = inlined_call_operand.hbm [shape: f32[1,2048], index: 0, kind: input, shape index: {}]
  %s1 = inlined_call_operand.hbm [shape: f32[1,2048], index: 1, kind: output, shape index: {}]
  %s2 = sld [smem:[#allocation0]]
  $region18: #{tpu_custom_call.1} parent=0
    _
  %s4 = ssub.s32 1, %s2
  %s5 = scalar_select 0, %s4, %s2
  $region1: #{tpu_custom_call.1} parent=0
    #allocation2 [shape = 'u8[8192]{0}', space=vmem, size = 0x2000, scoped, tag = 'input window, operand 0, single buffered']
    #allocation3 [shape = 's32[1]{0}', space=sflag, size = 0x4, scoped, tag = 'scoped memory for tpu_custom_call.1']
    #allocation4 [shape = 's32[1]{0}', space=sflag, size = 0x4, scoped, tag = 'scoped memory for tpu_custom_call.1']
    #allocation5 [shape = 'u8[8192]{0}', space=vmem, size = 0x2000, scoped, tag = 'output window, operand 0, single buffered']
    %6 = vsyncpa [#allocation3], 0
    %7 = vsyncpa [#allocation4], 0
    // Predicated region
    $region2: #{tpu_custom_call.1} parent=1 // pred_check
      _
    $region3: #{tpu_custom_call.1} parent=1 // pred_check_branch
      %9 = sbr.rel (0) target = $region5
    $region4: #{tpu_custom_call.1} parent=1 // pred_region
      %11 = vsyncadd [#allocation3], 0
      %s13 = sshll.u32 %s0, 4
      %s14 = int_to_ptr.hbm [resolvable:$true] %s13
      %s15 = sshll.u32 [#allocation2], 4
      %s16 = int_to_ptr.vmem [resolvable:$true] %s15
      %18 = dma.hbm_to_vmem [thread:$0]  %s14, 256, %s16, [#allocation3]
    $region5: #{tpu_custom_call.1} parent=1 // pred_fallthru
      _
    // Predicated region
    $region6: #{tpu_custom_call.1} parent=1 // pred_check
      _
    $region7: #{tpu_custom_call.1} parent=1 // pred_check_branch
      %20 = sbr.rel (0) target = $region9
    $region8: #{tpu_custom_call.1} parent=1 // pred_region
      %22 = dma.done [#allocation3], 256
    $region9: #{tpu_custom_call.1} parent=1 // pred_fallthru
      _
    %v23 = vld [vmem:[#allocation2] sm:$0xff]
    %v24 = vld [vmem:[#allocation2 + $0x8] sm:$0xff]
    %v25 = vmax.f32 %v23, 0.0
    %v26 = vmax.f32 %v24, 0.0
    %27 = vst [vmem:[#allocation5] sm:$0xff] %v25
    %28 = vst [vmem:[#allocation5 + $0x8] sm:$0xff] %v26
    // Predicated region
    $region10: #{tpu_custom_call.1} parent=1 // pred_check
      _
    $region11: #{tpu_custom_call.1} parent=1 // pred_check_branch
      %30 = sbr.rel (0) target = $region13
    $region12: #{tpu_custom_call.1} parent=1 // pred_region
      %32 = vsyncadd [#allocation4], 0
      %s34 = sshll.u32 [#allocation5], 4
      %s35 = int_to_ptr.vmem [resolvable:$true] %s34
      %s36 = sshll.u32 %s1, 4
      %s37 = int_to_ptr.hbm [resolvable:$true] %s36
      %39 = dma.vmem_to_hbm [thread:$0]  %s35, 256, %s37, [#allocation4]
    $region13: #{tpu_custom_call.1} parent=1 // pred_fallthru
      _
    // Predicated region
    $region14: #{tpu_custom_call.1} parent=1 // pred_check
      _
    $region15: #{tpu_custom_call.1} parent=1 // pred_check_branch
      %41 = sbr.rel (0) target = $region17
    $region16: #{tpu_custom_call.1} parent=1 // pred_region
      %43 = dma.done [#allocation4], 256
    $region17: #{tpu_custom_call.1} parent=1 // pred_fallthru
      _
    %44 = vsyncpa [#allocation3], 1
    %45 = vsyncpa [#allocation4], 1

</llo_original>
